<compile_context>
chip_gen: v5e
topology: v5e:2x2
jax: 0.10.0
libtpu: 0.0.40
codegen_flags: <defaults>
</compile_context>

<pallas_src>
import functools
import math

import jax
import jax.numpy as jnp
from jax.experimental import pallas as pl
from jax.experimental.pallas import tpu as pltpu


# ---------------------------------------------------------------------------
# helpers
# ---------------------------------------------------------------------------
def _layernorm(x, gamma, beta, eps=1e-5):
    # x: (T, C) f32, gamma/beta: (1, C)
    mu = jnp.mean(x, axis=-1, keepdims=True)
    var = jnp.mean((x - mu) ** 2, axis=-1, keepdims=True)
    return (x - mu) * jax.lax.rsqrt(var + eps) * gamma + beta


def _erf_poly(x):
    # Abramowitz & Stegun 7.1.26 polynomial, max abs error ~1.5e-7 (VPU+EUP only).
    a1, a2, a3, a4, a5 = 0.254829592, -0.284496736, 1.421413741, -1.453152027, 1.061405429
    p = 0.3275911
    ax = jnp.abs(x)
    t = 1.0 / (1.0 + p * ax)
    poly = ((((a5 * t + a4) * t + a3) * t + a2) * t + a1) * t
    y = 1.0 - poly * jnp.exp(-ax * ax)
    return jnp.where(x < 0, -y, y)


def _gelu_exact(x):
    # matches nn.GELU() (exact erf form) to ~1e-7
    return 0.5 * x * (1.0 + _erf_poly(x * 0.7071067811865476))


def _pick_tile(full, cap, aligns):
    """Largest tile <= cap that divides `full` and is a multiple of one of `aligns`
    (tried in order); falls back to `full` (full-extent blocks are always legal)."""
    if full <= cap:
        return full
    for align in aligns:
        t = (cap // align) * align
        while t >= align:
            if full % t == 0:
                return t
            t -= align
    return full


def _vmem_capacity_bytes():
    try:
        info = pltpu.get_tpu_info()
        return int(getattr(info, "vmem_capacity_bytes", 64 * 1024 * 1024))
    except Exception:
        return 64 * 1024 * 1024     # conservative default (v7x-sized)


# ---------------------------------------------------------------------------
# Kernel 1: (q, k, v) = LN1(x) @ (Wq, Wk, Wv) + b        bf16 outputs
#           (softmax scale is pre-folded into Wq / bq by prepare_params)
# grid = (B, T//tm, C//tn); LN1 computed once per row tile into scratch.
# ---------------------------------------------------------------------------
def ln1_qkv_kernel(x_ref, g_ref, b_ref, wq_ref, wk_ref, wv_ref,
                   bq_ref, bk_ref, bv_ref, q_ref, k_ref, v_ref, hln_sc):
    @pl.when(pl.program_id(2) == 0)
    def _ln_once():
        hln_sc[...] = _layernorm(x_ref[0], g_ref[...], b_ref[...]).astype(jnp.bfloat16)

    h = hln_sc[...]
    q_ref[0] = (jnp.dot(h, wq_ref[...], preferred_element_type=jnp.float32)
                + bq_ref[...]).astype(q_ref.dtype)
    k_ref[0] = (jnp.dot(h, wk_ref[...], preferred_element_type=jnp.float32)
                + bk_ref[...]).astype(k_ref.dtype)
    v_ref[0] = (jnp.dot(h, wv_ref[...], preferred_element_type=jnp.float32)
                + bv_ref[...]).astype(v_ref.dtype)


# ---------------------------------------------------------------------------
# Kernel 2: y1 = x + c_proj( causal_flash_attention(q, k, v) )
# grid = (B, T//tq, T//tk), kv axis innermost ("arbitrary"), online softmax.
# ---------------------------------------------------------------------------
def flash_attn_kernel(x_ref, q_ref, k_ref, v_ref, wp_ref, bp_ref, o_ref,
                      m_sc, l_sc, acc_sc, *, n_head):
    _, tq, C = q_ref.shape
    _, tk, _ = k_ref.shape
    hd = C // n_head
    LREP = m_sc.shape[-1]              # lane-replication width (128)
    qi = pl.program_id(1)
    ki = pl.program_id(2)

    q_first = qi * tq
    q_last = qi * tq + tq - 1
    k_first = ki * tk
    k_last = ki * tk + tk - 1

    @pl.when(ki == 0)
    def _init():
        m_sc[...] = jnp.full_like(m_sc, -1e30)
        l_sc[...] = jnp.zeros_like(l_sc)
        acc_sc[...] = jnp.zeros_like(acc_sc)

    def _accumulate(apply_mask):
        q = q_ref[0].reshape(tq, n_head, hd)               # bf16, scale pre-folded
        k = k_ref[0].reshape(tk, n_head, hd)
        v = v_ref[0].reshape(tk, n_head, hd)
        s = jnp.einsum("qhd,khd->hqk", q, k,
                       preferred_element_type=jnp.float32)  # (H, tq, tk)
        if apply_mask:
            # single 2-D iota, broadcast over heads; only built for straddling blocks
            row = q_first + jax.lax.broadcasted_iota(jnp.int32, (tq, tk), 0)
            col = k_first + jax.lax.broadcasted_iota(jnp.int32, (tq, tk), 1)
            s = jnp.where((col <= row)[None, :, :], s, -1e30)   # finite: no NaN risk

        m_prev = m_sc[...]                                   # (H, tq, 128) replicated
        m_new = jnp.maximum(m_prev, jnp.max(s, axis=-1, keepdims=True))
        alpha = jnp.exp(m_prev - m_new)                      # replicated across lanes
        p = jnp.exp(s - m_new[..., :1])
        l_sc[...] = alpha * l_sc[...] + jnp.sum(p, axis=-1, keepdims=True)
        alpha_a = alpha if hd == LREP else alpha[..., :1]
        acc_sc[...] = alpha_a * acc_sc[...] + jnp.einsum(
            "hqk,khd->hqd", p.astype(jnp.bfloat16), v,
            preferred_element_type=jnp.float32)
        m_sc[...] = m_new

    needed = k_first <= q_last          # block not entirely above the diagonal
    straddles = k_last > q_first        # block may contain masked (col > row) entries

    @pl.when(jnp.logical_and(needed, jnp.logical_not(straddles)))
    def _unmasked_block():
        _accumulate(apply_mask=False)

    @pl.when(jnp.logical_and(needed, straddles))
    def _masked_block():
        _accumulate(apply_mask=True)

    @pl.when(ki == pl.num_programs(2) - 1)
    def _finalize():
        inv = pl.reciprocal(l_sc[...], approx=True)
        inv_a = inv if hd == LREP else inv[..., :1]
        ctx = (acc_sc[...] * inv_a).astype(jnp.bfloat16)     # (H, tq, hd)
        # per-head c_proj straight from the accumulator (no transpose / relayout)
        y = jnp.zeros((tq, C), jnp.float32)
        for h in range(n_head):                              # static, small unroll
            y = y + jnp.dot(ctx[h], wp_ref[h],
                            preferred_element_type=jnp.float32)
        o_ref[0] = (x_ref[0] + y + bp_ref[...]).astype(o_ref.dtype)   # residual 1


# ---------------------------------------------------------------------------
# Kernel 3: out = y1 + c_proj( GELU( c_fc( LN2(y1) ) ) )
# grid = (B, T//tm, H//th); hidden dim tiled with f32 accumulator.
# ---------------------------------------------------------------------------
def ffn_kernel(y_ref, g_ref, b_ref, wfc_ref, bfc_ref, wffn_ref, bffn_ref,
               o_ref, hln_sc, acc_sc):
    ht = pl.program_id(2)

    @pl.when(ht == 0)
    def _init():
        hln_sc[...] = _layernorm(y_ref[0], g_ref[...], b_ref[...]).astype(jnp.bfloat16)
        acc_sc[...] = jnp.zeros_like(acc_sc)

    h = jnp.dot(hln_sc[...], wfc_ref[...],
                preferred_element_type=jnp.float32) + bfc_ref[...]
    h = _gelu_exact(h)
    acc_sc[...] += jnp.dot(h.astype(jnp.bfloat16), wffn_ref[...],
                           preferred_element_type=jnp.float32)

    @pl.when(ht == pl.num_programs(2) - 1)
    def _finalize():
        o_ref[0] = (y_ref[0] + acc_sc[...] + bffn_ref[...]).astype(o_ref.dtype)


# ---------------------------------------------------------------------------
# One-time parameter preparation (hoisted out of the per-call path):
#   split packed QKV weight, fold softmax scale into Wq/bq, cast weights to bf16,
#   reshape c_proj weight to per-head (H, hd, C).
# ---------------------------------------------------------------------------
def prepare_params(params, n_head):
    C = params["w_attn_proj"].shape[0]
    hd = C // n_head
    sm_scale = 1.0 / math.sqrt(hd)
    w_qkv, b_qkv = params["w_qkv"], params["b_qkv"]
    return {
        "ln1_g": params["ln1_g"], "ln1_b": params["ln1_b"],
        "wq": (w_qkv[:, 0 * C:1 * C] * sm_scale).astype(jnp.bfloat16),
        "wk": w_qkv[:, 1 * C:2 * C].astype(jnp.bfloat16),
        "wv": w_qkv[:, 2 * C:3 * C].astype(jnp.bfloat16),
        "bq": b_qkv[:, 0 * C:1 * C] * sm_scale,
        "bk": b_qkv[:, 1 * C:2 * C],
        "bv": b_qkv[:, 2 * C:3 * C],
        # TODO(synk): for very large n_embd on v7x, additionally block wp_h over the
        # head axis via BlockSpec so the resident c_proj weight stays well under VMEM.
        "wp_h": params["w_attn_proj"].reshape(n_head, hd, C).astype(jnp.bfloat16),
        "bp": params["b_attn_proj"],
        "ln2_g": params["ln2_g"], "ln2_b": params["ln2_b"],
        "w_fc": params["w_fc"].astype(jnp.bfloat16),
        "b_fc": params["b_fc"],
        "w_ffn_proj": params["w_ffn_proj"].astype(jnp.bfloat16),
        "b_ffn_proj": params["b_ffn_proj"],
    }


# ---------------------------------------------------------------------------
# Wrapper
# ---------------------------------------------------------------------------
def transformer_block(x, p, n_head):
    B, T, C = x.shape
    H = p["w_fc"].shape[1]
    hd = C // n_head
    dt = x.dtype

    # generation-aware tile caps / VMEM budget
    vmem_cap = _vmem_capacity_bytes()
    if vmem_cap >= 100 * (1 << 20):          # v5e / v6e: 128 MiB VMEM
        seq_cap, col_cap, hid_cap = 512, 512, 1024
        vmem_limit = 96 * (1 << 20)
    else:                                     # v7x: 64 MiB VMEM
        seq_cap, col_cap, hid_cap = 256, 512, 512
        vmem_limit = 52 * (1 << 20)

    tm = _pick_tile(T, seq_cap, (128, 16))   # sequence tile (qkv / ffn)
    tq = tm                                   # q tile
    tk = _pick_tile(T, seq_cap, (128, 16))   # kv tile
    tn = _pick_tile(C, col_cap, (128,))      # qkv output-column tile
    th = _pick_tile(H, hid_cap, (128,))      # ffn hidden tile

    # ---------------- kernel 1: LN1 + QKV ----------------
    q, k, v = pl.pallas_call(
        ln1_qkv_kernel,
        out_shape=tuple(jax.ShapeDtypeStruct((B, T, C), jnp.bfloat16)
                        for _ in range(3)),
        grid_spec=pltpu.PrefetchScalarGridSpec(
            num_scalar_prefetch=0,
            grid=(B, T // tm, C // tn),
            in_specs=[
                pl.BlockSpec((1, tm, C), lambda b, m, n: (b, m, 0)),   # x
                pl.BlockSpec((1, C), lambda b, m, n: (0, 0)),          # ln1 gamma
                pl.BlockSpec((1, C), lambda b, m, n: (0, 0)),          # ln1 beta
                pl.BlockSpec((C, tn), lambda b, m, n: (0, n)),         # Wq (pre-scaled)
                pl.BlockSpec((C, tn), lambda b, m, n: (0, n)),         # Wk
                pl.BlockSpec((C, tn), lambda b, m, n: (0, n)),         # Wv
                pl.BlockSpec((1, tn), lambda b, m, n: (0, n)),         # bq (pre-scaled)
                pl.BlockSpec((1, tn), lambda b, m, n: (0, n)),         # bk
                pl.BlockSpec((1, tn), lambda b, m, n: (0, n)),         # bv
            ],
            out_specs=[
                pl.BlockSpec((1, tm, tn), lambda b, m, n: (b, m, n)),
                pl.BlockSpec((1, tm, tn), lambda b, m, n: (b, m, n)),
                pl.BlockSpec((1, tm, tn), lambda b, m, n: (b, m, n)),
            ],
            scratch_shapes=[pltpu.VMEM((tm, C), jnp.bfloat16)],        # LN1(x) reuse
        ),
        compiler_params=pltpu.CompilerParams(
            dimension_semantics=("parallel", "parallel", "arbitrary"),
            vmem_limit_bytes=vmem_limit),
    )(x, p["ln1_g"], p["ln1_b"], p["wq"], p["wk"], p["wv"],
      p["bq"], p["bk"], p["bv"])

    # ---------------- kernel 2: flash attention + c_proj + residual ----------------
    # K/V index_map clamped at the causal diagonal: grid steps above the diagonal
    # re-use the already-resident block (no new DMA) and are compute-skipped.
    def kv_index_map(b, qi, ki):
        return (b, jnp.minimum(ki, (qi * tq + tq - 1) // tk), 0)

    # TODO(synk): on v5e, if profiling shows exposed K/V DMA, add
    # pipeline_mode=pl.Buffered(3) to the k/v BlockSpecs below.
    y1 = pl.pallas_call(
        functools.partial(flash_attn_kernel, n_head=n_head),
        out_shape=jax.ShapeDtypeStruct((B, T, C), dt),
        grid_spec=pltpu.PrefetchScalarGridSpec(
            num_scalar_prefetch=0,
            grid=(B, T // tq, T // tk),
            in_specs=[
                pl.BlockSpec((1, tq, C), lambda b, qi, ki: (b, qi, 0)),   # x (residual)
                pl.BlockSpec((1, tq, C), lambda b, qi, ki: (b, qi, 0)),   # q
                pl.BlockSpec((1, tk, C), kv_index_map),                   # k
                pl.BlockSpec((1, tk, C), kv_index_map),                   # v
                pl.BlockSpec((n_head, hd, C), lambda b, qi, ki: (0, 0, 0)),  # W_proj/head
                pl.BlockSpec((1, C), lambda b, qi, ki: (0, 0)),           # b_proj
            ],
            out_specs=pl.BlockSpec((1, tq, C), lambda b, qi, ki: (b, qi, 0)),
            scratch_shapes=[
                pltpu.VMEM((n_head, tq, 128), jnp.float32),    # running max (lane-rep)
                pltpu.VMEM((n_head, tq, 128), jnp.float32),    # running denom
                pltpu.VMEM((n_head, tq, hd), jnp.float32),     # running numerator
            ],
        ),
        compiler_params=pltpu.CompilerParams(
            dimension_semantics=("parallel", "parallel", "arbitrary"),
            vmem_limit_bytes=vmem_limit),
    )(x, q, k, v, p["wp_h"], p["bp"])

    # ---------------- kernel 3: LN2 + FFN + residual ----------------
    out = pl.pallas_call(
        ffn_kernel,
        out_shape=jax.ShapeDtypeStruct((B, T, C), dt),
        grid_spec=pltpu.PrefetchScalarGridSpec(
            num_scalar_prefetch=0,
            grid=(B, T // tm, H // th),
            in_specs=[
                pl.BlockSpec((1, tm, C), lambda b, m, h: (b, m, 0)),   # y1
                pl.BlockSpec((1, C), lambda b, m, h: (0, 0)),          # ln2 gamma
                pl.BlockSpec((1, C), lambda b, m, h: (0, 0)),          # ln2 beta
                pl.BlockSpec((C, th), lambda b, m, h: (0, h)),         # W_fc
                pl.BlockSpec((1, th), lambda b, m, h: (0, h)),         # b_fc
                pl.BlockSpec((th, C), lambda b, m, h: (h, 0)),         # W_proj (ffn)
                pl.BlockSpec((1, C), lambda b, m, h: (0, 0)),          # b_proj (ffn)
            ],
            out_specs=pl.BlockSpec((1, tm, C), lambda b, m, h: (b, m, 0)),
            scratch_shapes=[
                pltpu.VMEM((tm, C), jnp.bfloat16),   # LN2 output (reused across h tiles)
                pltpu.VMEM((tm, C), jnp.float32),    # FFN accumulator
            ],
        ),
        compiler_params=pltpu.CompilerParams(
            dimension_semantics=("parallel", "parallel", "arbitrary"),
            vmem_limit_bytes=vmem_limit),
    )(y1, p["ln2_g"], p["ln2_b"], p["w_fc"], p["b_fc"],
      p["w_ffn_proj"], p["b_ffn_proj"])

    return out


# ---------------------------------------------------------------------------
# Pure-JAX f32 reference (mirrors the PyTorch module, inference mode)
# ---------------------------------------------------------------------------
def reference_block(x, params, n_head):
    def ln(t, g, b, eps=1e-5):
        mu = jnp.mean(t, axis=-1, keepdims=True)
        var = jnp.mean((t - mu) ** 2, axis=-1, keepdims=True)
        return (t - mu) * jax.lax.rsqrt(var + eps) * g + b

    B, T, C = x.shape
    hd = C // n_head
    h = ln(x, params["ln1_g"], params["ln1_b"])
    qkv = h @ params["w_qkv"] + params["b_qkv"]
    qr, kr, vr = jnp.split(qkv, 3, axis=-1)
    qr = qr.reshape(B, T, n_head, hd).transpose(0, 2, 1, 3)
    kr = kr.reshape(B, T, n_head, hd).transpose(0, 2, 1, 3)
    vr = vr.reshape(B, T, n_head, hd).transpose(0, 2, 1, 3)
    s = (qr @ kr.transpose(0, 1, 3, 2)) / math.sqrt(hd)
    mask = jnp.tril(jnp.ones((T, T), bool))
    s = jnp.where(mask, s, -jnp.inf)
    p = jax.nn.softmax(s, axis=-1)
    y = (p @ vr).transpose(0, 2, 1, 3).reshape(B, T, C)
    y = y @ params["w_attn_proj"] + params["b_attn_proj"]
    x = x + y
    h = ln(x, params["ln2_g"], params["ln2_b"])
    h = h @ params["w_fc"] + params["b_fc"]
    h = jax.nn.gelu(h, approximate=False)
    h = h @ params["w_ffn_proj"] + params["b_ffn_proj"]
    return x + h


# ---------------------------------------------------------------------------
# Deterministic parameter init (shapes follow TransformerBlock.__init__)
# ---------------------------------------------------------------------------
def init_params(key, n_embd, n_head, scale):
    ks = jax.random.split(key, 4)
    hidden = scale * n_embd
    std = 0.02
    return {
        "ln1_g": jnp.ones((1, n_embd), jnp.float32),
        "ln1_b": jnp.zeros((1, n_embd), jnp.float32),
        "w_qkv": std * jax.random.normal(ks[0], (n_embd, 3 * n_embd), jnp.float32),
        "b_qkv": jnp.zeros((1, 3 * n_embd), jnp.float32),
        "w_attn_proj": std * jax.random.normal(ks[1], (n_embd, n_embd), jnp.float32),
        "b_attn_proj": jnp.zeros((1, n_embd), jnp.float32),
        "ln2_g": jnp.ones((1, n_embd), jnp.float32),
        "ln2_b": jnp.zeros((1, n_embd), jnp.float32),
        "w_fc": std * jax.random.normal(ks[2], (n_embd, hidden), jnp.float32),
        "b_fc": jnp.zeros((1, hidden), jnp.float32),
        "w_ffn_proj": std * jax.random.normal(ks[3], (hidden, n_embd), jnp.float32),
        "b_ffn_proj": jnp.zeros((1, n_embd), jnp.float32),
    }


if __name__ == "__main__":
    # small config: bsz=2, sl=8, n_embd=32, n_head=4, scale=4, bias=True,
    # dropout=0 (inference), use_dilated_attn=False
    B, T, C, n_head, scale = 2, 8, 32, 4, 4

    key = jax.random.PRNGKey(0)
    k_x, k_p = jax.random.split(key)
    x = jax.random.normal(k_x, (B, T, C), jnp.float32)
    params = init_params(k_p, C, n_head, scale)

    prepped = prepare_params(params, n_head)     # one-time weight prep (hoisted)
    y = transformer_block(x, prepped, n_head)
    jax.block_until_ready(y)
    assert y.shape == (B, T, C)

    ref = reference_block(x, params, n_head)
    err = float(jnp.max(jnp.abs(y - ref)))
    assert err == err and err < 2e-2, f"mismatch vs reference: max abs err={err}"

    print("KERNEL_OK")
</pallas_src>

<mosaic_0001>
module attributes {stable_mosaic.version = 11 : i64} {
  func.func @ln1_qkv_kernel(%arg0: i32, %arg1: i32, %arg2: i32, %arg3: memref<1x8x32xf32, #tpu.memory_space<vmem>>, %arg4: memref<1x32xf32, #tpu.memory_space<vmem>>, %arg5: memref<1x32xf32, #tpu.memory_space<vmem>>, %arg6: memref<32x32xbf16, #tpu.memory_space<vmem>>, %arg7: memref<32x32xbf16, #tpu.memory_space<vmem>>, %arg8: memref<32x32xbf16, #tpu.memory_space<vmem>>, %arg9: memref<1x32xf32, #tpu.memory_space<vmem>>, %arg10: memref<1x32xf32, #tpu.memory_space<vmem>>, %arg11: memref<1x32xf32, #tpu.memory_space<vmem>>, %arg12: memref<1x8x32xbf16, #tpu.memory_space<vmem>>, %arg13: memref<1x8x32xbf16, #tpu.memory_space<vmem>>, %arg14: memref<1x8x32xbf16, #tpu.memory_space<vmem>>, %arg15: memref<8x32xbf16, #tpu.memory_space<vmem>>) attributes {dimension_semantics = [#tpu.dimension_semantics<parallel>, #tpu.dimension_semantics<parallel>, #tpu.dimension_semantics<arbitrary>], iteration_bounds = array<i64: 2, 1, 1>, scalar_prefetch = 0 : i64, scratch_operands = 1 : i64, tpu.core_type = #tpu.core_type<tc>, window_params = [{transform_indices = @transform_0, window_bounds = array<i64: 1, 8, 32>}, {pipeline_mode = #tpu.pipeline_mode<synchronous>, transform_indices = @transform_1, window_bounds = array<i64: 1, 32>}, {pipeline_mode = #tpu.pipeline_mode<synchronous>, transform_indices = @transform_2, window_bounds = array<i64: 1, 32>}, {transform_indices = @transform_3, window_bounds = array<i64: 32, 32>}, {transform_indices = @transform_4, window_bounds = array<i64: 32, 32>}, {transform_indices = @transform_5, window_bounds = array<i64: 32, 32>}, {transform_indices = @transform_6, window_bounds = array<i64: 1, 32>}, {transform_indices = @transform_7, window_bounds = array<i64: 1, 32>}, {transform_indices = @transform_8, window_bounds = array<i64: 1, 32>}, {transform_indices = @transform_9, window_bounds = array<i64: 1, 8, 32>}, {transform_indices = @transform_10, window_bounds = array<i64: 1, 8, 32>}, {transform_indices = @transform_11, window_bounds = array<i64: 1, 8, 32>}]} {
    %c0_i32 = arith.constant 0 : i32
    %0 = arith.cmpi eq, %arg2, %c0_i32 : i32
    %1 = arith.extui %0 : i1 to i32
    %c0_i32_0 = arith.constant 0 : i32
    %2 = arith.cmpi ne, %1, %c0_i32_0 : i32
    scf.if %2 {
      %c0_25 = arith.constant 0 : index
      %c0_26 = arith.constant 0 : index
      %c0_27 = arith.constant 0 : index
      %31 = vector.load %arg3[%c0_25, %c0_26, %c0_27] : memref<1x8x32xf32, #tpu.memory_space<vmem>>, vector<1x8x32xf32>
      %32 = vector.shape_cast %31 : vector<1x8x32xf32> to vector<8x32xf32>
      %c0_28 = arith.constant 0 : index
      %c0_29 = arith.constant 0 : index
      %33 = vector.load %arg4[%c0_28, %c0_29] : memref<1x32xf32, #tpu.memory_space<vmem>>, vector<1x32xf32>
      %c0_30 = arith.constant 0 : index
      %c0_31 = arith.constant 0 : index
      %34 = vector.load %arg5[%c0_30, %c0_31] : memref<1x32xf32, #tpu.memory_space<vmem>>, vector<1x32xf32>
      %cst_32 = arith.constant dense<0.000000e+00> : vector<8xf32>
      %35 = vector.multi_reduction <add>, %32, %cst_32 [1] : vector<8x32xf32> to vector<8xf32>
      %36 = vector.shape_cast %35 : vector<8xf32> to vector<8x1xf32>
      %cst_33 = arith.constant 3.200000e+01 : f32
      %37 = vector.broadcast %cst_33 : f32 to vector<8x1xf32>
      %38 = arith.divf %36, %37 : vector<8x1xf32>
      %39 = vector.broadcast %38 : vector<8x1xf32> to vector<8x32xf32>
      %40 = arith.subf %32, %39 : vector<8x32xf32>
      %41 = arith.mulf %40, %40 : vector<8x32xf32>
      %cst_34 = arith.constant dense<0.000000e+00> : vector<8xf32>
      %42 = vector.multi_reduction <add>, %41, %cst_34 [1] : vector<8x32xf32> to vector<8xf32>
      %43 = vector.shape_cast %42 : vector<8xf32> to vector<8x1xf32>
      %cst_35 = arith.constant 3.200000e+01 : f32
      %44 = vector.broadcast %cst_35 : f32 to vector<8x1xf32>
      %45 = arith.divf %43, %44 : vector<8x1xf32>
      %46 = vector.broadcast %38 : vector<8x1xf32> to vector<8x32xf32>
      %47 = arith.subf %32, %46 : vector<8x32xf32>
      %cst_36 = arith.constant 9.99999974E-6 : f32
      %48 = vector.broadcast %cst_36 : f32 to vector<8x1xf32>
      %49 = arith.addf %45, %48 : vector<8x1xf32>
      %50 = math.rsqrt %49 : vector<8x1xf32>
      %51 = vector.broadcast %50 : vector<8x1xf32> to vector<8x32xf32>
      %52 = arith.mulf %47, %51 : vector<8x32xf32>
      %53 = vector.broadcast %33 : vector<1x32xf32> to vector<8x32xf32>
      %54 = arith.mulf %52, %53 : vector<8x32xf32>
      %55 = vector.broadcast %34 : vector<1x32xf32> to vector<8x32xf32>
      %56 = arith.addf %54, %55 : vector<8x32xf32>
      %57 = arith.truncf %56 : vector<8x32xf32> to vector<8x32xbf16>
      %c0_37 = arith.constant 0 : index
      %c0_38 = arith.constant 0 : index
      %58 = vector.load %arg15[%c0_37, %c0_38] : memref<8x32xbf16, #tpu.memory_space<vmem>>, vector<8x32xbf16>
      tpu.vector_store %arg15[%c0_37, %c0_38], %57 {strides = array<i32>} : memref<8x32xbf16, #tpu.memory_space<vmem>>, vector<8x32xbf16>,
    } else {
    }
    %c0 = arith.constant 0 : index
    %c0_1 = arith.constant 0 : index
    %3 = vector.load %arg15[%c0, %c0_1] : memref<8x32xbf16, #tpu.memory_space<vmem>>, vector<8x32xbf16>
    %c0_2 = arith.constant 0 : index
    %c0_3 = arith.constant 0 : index
    %4 = vector.load %arg6[%c0_2, %c0_3] : memref<32x32xbf16, #tpu.memory_space<vmem>>, vector<32x32xbf16>
    %cst = arith.constant dense<0.000000e+00> : vector<8x32xf32>
    %5 = tpu.matmul %3, %4, %cst {dimension_numbers = #tpu.dot_dimension_numbers<[1], [0], [0], [1], [0, 0, 1, 1], [], []>} : vector<8x32xbf16>, vector<32x32xbf16>, vector<8x32xf32> -> vector<8x32xf32>
    %c0_4 = arith.constant 0 : index
    %c0_5 = arith.constant 0 : index
    %6 = vector.load %arg9[%c0_4, %c0_5] : memref<1x32xf32, #tpu.memory_space<vmem>>, vector<1x32xf32>
    %7 = vector.broadcast %6 : vector<1x32xf32> to vector<8x32xf32>
    %8 = arith.addf %5, %7 : vector<8x32xf32>
    %9 = arith.truncf %8 : vector<8x32xf32> to vector<8x32xbf16>
    %c0_6 = arith.constant 0 : index
    %c0_7 = arith.constant 0 : index
    %c0_8 = arith.constant 0 : index
    %10 = vector.load %arg12[%c0_6, %c0_7, %c0_8] : memref<1x8x32xbf16, #tpu.memory_space<vmem>>, vector<1x8x32xbf16>
    %11 = vector.shape_cast %10 : vector<1x8x32xbf16> to vector<8x32xbf16>
    %12 = vector.shape_cast %9 : vector<8x32xbf16> to vector<1x8x32xbf16>
    tpu.vector_store %arg12[%c0_6, %c0_7, %c0_8], %12 {strides = array<i32>} : memref<1x8x32xbf16, #tpu.memory_space<vmem>>, vector<1x8x32xbf16>,
    %c0_9 = arith.constant 0 : index
    %c0_10 = arith.constant 0 : index
    %13 = vector.load %arg7[%c0_9, %c0_10] : memref<32x32xbf16, #tpu.memory_space<vmem>>, vector<32x32xbf16>
    %cst_11 = arith.constant dense<0.000000e+00> : vector<8x32xf32>
    %14 = tpu.matmul %3, %13, %cst_11 {dimension_numbers = #tpu.dot_dimension_numbers<[1], [0], [0], [1], [0, 0, 1, 1], [], []>} : vector<8x32xbf16>, vector<32x32xbf16>, vector<8x32xf32> -> vector<8x32xf32>
    %c0_12 = arith.constant 0 : index
    %c0_13 = arith.constant 0 : index
    %15 = vector.load %arg10[%c0_12, %c0_13] : memref<1x32xf32, #tpu.memory_space<vmem>>, vector<1x32xf32>
    %16 = vector.broadcast %15 : vector<1x32xf32> to vector<8x32xf32>
    %17 = arith.addf %14, %16 : vector<8x32xf32>
    %18 = arith.truncf %17 : vector<8x32xf32> to vector<8x32xbf16>
    %c0_14 = arith.constant 0 : index
    %c0_15 = arith.constant 0 : index
    %c0_16 = arith.constant 0 : index
    %19 = vector.load %arg13[%c0_14, %c0_15, %c0_16] : memref<1x8x32xbf16, #tpu.memory_space<vmem>>, vector<1x8x32xbf16>
    %20 = vector.shape_cast %19 : vector<1x8x32xbf16> to vector<8x32xbf16>
    %21 = vector.shape_cast %18 : vector<8x32xbf16> to vector<1x8x32xbf16>
    tpu.vector_store %arg13[%c0_14, %c0_15, %c0_16], %21 {strides = array<i32>} : memref<1x8x32xbf16, #tpu.memory_space<vmem>>, vector<1x8x32xbf16>,
    %c0_17 = arith.constant 0 : index
    %c0_18 = arith.constant 0 : index
    %22 = vector.load %arg8[%c0_17, %c0_18] : memref<32x32xbf16, #tpu.memory_space<vmem>>, vector<32x32xbf16>
    %cst_19 = arith.constant dense<0.000000e+00> : vector<8x32xf32>
    %23 = tpu.matmul %3, %22, %cst_19 {dimension_numbers = #tpu.dot_dimension_numbers<[1], [0], [0], [1], [0, 0, 1, 1], [], []>} : vector<8x32xbf16>, vector<32x32xbf16>, vector<8x32xf32> -> vector<8x32xf32>
    %c0_20 = arith.constant 0 : index
    %c0_21 = arith.constant 0 : index
    %24 = vector.load %arg11[%c0_20, %c0_21] : memref<1x32xf32, #tpu.memory_space<vmem>>, vector<1x32xf32>
    %25 = vector.broadcast %24 : vector<1x32xf32> to vector<8x32xf32>
    %26 = arith.addf %23, %25 : vector<8x32xf32>
    %27 = arith.truncf %26 : vector<8x32xf32> to vector<8x32xbf16>
    %c0_22 = arith.constant 0 : index
    %c0_23 = arith.constant 0 : index
    %c0_24 = arith.constant 0 : index
    %28 = vector.load %arg14[%c0_22, %c0_23, %c0_24] : memref<1x8x32xbf16, #tpu.memory_space<vmem>>, vector<1x8x32xbf16>
    %29 = vector.shape_cast %28 : vector<1x8x32xbf16> to vector<8x32xbf16>
    %30 = vector.shape_cast %27 : vector<8x32xbf16> to vector<1x8x32xbf16>
    tpu.vector_store %arg14[%c0_22, %c0_23, %c0_24], %30 {strides = array<i32>} : memref<1x8x32xbf16, #tpu.memory_space<vmem>>, vector<1x8x32xbf16>,
    return
  }
  func.func @transform_0(%arg0: i32, %arg1: i32, %arg2: i32) -> (i32, i32, i32) {
    %c0_i32 = arith.constant 0 : i32
    %c0_i32_0 = arith.constant 0 : i32
    return %arg0, %arg1, %c0_i32 : i32, i32, i32
  }
  func.func @transform_1(%arg0: i32, %arg1: i32, %arg2: i32) -> (i32, i32) {
    %c0_i32 = arith.constant 0 : i32
    %c0_i32_0 = arith.constant 0 : i32
    %c0_i32_1 = arith.constant 0 : i32
    return %c0_i32, %c0_i32_0 : i32, i32
  }
  func.func @transform_2(%arg0: i32, %arg1: i32, %arg2: i32) -> (i32, i32) {
    %c0_i32 = arith.constant 0 : i32
    %c0_i32_0 = arith.constant 0 : i32
    %c0_i32_1 = arith.constant 0 : i32
    return %c0_i32, %c0_i32_0 : i32, i32
  }
  func.func @transform_3(%arg0: i32, %arg1: i32, %arg2: i32) -> (i32, i32) {
    %c0_i32 = arith.constant 0 : i32
    %c0_i32_0 = arith.constant 0 : i32
    return %c0_i32, %arg2 : i32, i32
  }
  func.func @transform_4(%arg0: i32, %arg1: i32, %arg2: i32) -> (i32, i32) {
    %c0_i32 = arith.constant 0 : i32
    %c0_i32_0 = arith.constant 0 : i32
    return %c0_i32, %arg2 : i32, i32
  }
  func.func @transform_5(%arg0: i32, %arg1: i32, %arg2: i32) -> (i32, i32) {
    %c0_i32 = arith.constant 0 : i32
    %c0_i32_0 = arith.constant 0 : i32
    return %c0_i32, %arg2 : i32, i32
  }
  func.func @transform_6(%arg0: i32, %arg1: i32, %arg2: i32) -> (i32, i32) {
    %c0_i32 = arith.constant 0 : i32
    %c0_i32_0 = arith.constant 0 : i32
    return %c0_i32, %arg2 : i32, i32
  }
  func.func @transform_7(%arg0: i32, %arg1: i32, %arg2: i32) -> (i32, i32) {
    %c0_i32 = arith.constant 0 : i32
    %c0_i32_0 = arith.constant 0 : i32
    return %c0_i32, %arg2 : i32, i32
  }
  func.func @transform_8(%arg0: i32, %arg1: i32, %arg2: i32) -> (i32, i32) {
    %c0_i32 = arith.constant 0 : i32
    %c0_i32_0 = arith.constant 0 : i32
    return %c0_i32, %arg2 : i32, i32
  }
  func.func @transform_9(%arg0: i32, %arg1: i32, %arg2: i32) -> (i32, i32, i32) {
    %c0_i32 = arith.constant 0 : i32
    return %arg0, %arg1, %arg2 : i32, i32, i32
  }
  func.func @transform_10(%arg0: i32, %arg1: i32, %arg2: i32) -> (i32, i32, i32) {
    %c0_i32 = arith.constant 0 : i32
    return %arg0, %arg1, %arg2 : i32, i32, i32
  }
  func.func @transform_11(%arg0: i32, %arg1: i32, %arg2: i32) -> (i32, i32, i32) {
    %c0_i32 = arith.constant 0 : i32
    return %arg0, %arg1, %arg2 : i32, i32, i32
  }
}

</mosaic_0001>

<llo_original>
// kernel: tpu_custom_call.1
$region0: #{tpu_custom_call.1}
  #allocation0 [shape = 'u32[]', space=smem, size = 0x4, offset = 0x4, fixed_abs, tag = 'smem constant byte address 0x4 - core index']
  #allocation1 [shape = 'u32[72,128]{1,0:T(1,128)}', space=vmem, size = 0x9000, scoped, tag = 'internal scratch']
  #allocation2 [shape = 'bf16[8,32]{1,0:T(8,128)(2,1)}', space=vmem, size = 0x800, scoped, tag = 'scratch operand']
  %s0 = inlined_call_operand.hbm [shape: f32[2,8,32], index: 0, kind: input, shape index: {}]
  %s1 = inlined_call_operand.hbm [shape: f32[1,32], index: 1, kind: input, shape index: {}]
  %s2 = inlined_call_operand.vmem [shape: f32[1,32], index: 2, kind: input, shape index: {}]
  %s3 = inlined_call_operand.hbm [shape: bf16[32,32], index: 3, kind: input, shape index: {}]
  %s4 = inlined_call_operand.hbm [shape: bf16[32,32], index: 4, kind: input, shape index: {}]
  %s5 = inlined_call_operand.hbm [shape: bf16[32,32], index: 5, kind: input, shape index: {}]
  %s6 = inlined_call_operand.vmem [shape: f32[1,32], index: 6, kind: input, shape index: {}]
  %s7 = inlined_call_operand.vmem [shape: f32[1,32], index: 7, kind: input, shape index: {}]
  %s8 = inlined_call_operand.vmem [shape: f32[1,32], index: 8, kind: input, shape index: {}]
  %s9 = inlined_call_operand.hbm [shape: bf16[2,8,32], index: 9, kind: output, shape index: {0}]
  %s10 = inlined_call_operand.hbm [shape: bf16[2,8,32], index: 10, kind: output, shape index: {1}]
  %s11 = inlined_call_operand.hbm [shape: bf16[2,8,32], index: 11, kind: output, shape index: {2}]
  %12 = xla_tuple %s9, %s10, %s11
  %s13 = sld [smem:[#allocation0]]
  $region109: #{tpu_custom_call.1} parent=0
    _
  %s15 = ssub.s32 1, %s13
  %s16 = scalar_select 0, %s15, %s13
  $region1: #{tpu_custom_call.1} parent=0
    #allocation3 [shape = 'u8[8192]{0}', space=vmem, size = 0x2000, scoped, tag = 'input window, operand 0']
    #allocation4 [shape = 's32[2]{0}', space=sflag, size = 0x8, scoped, tag = 'scoped memory for tpu_custom_call.1']
    #allocation5 [shape = 's32[2]{0}', space=sflag, size = 0x8, scoped, tag = 'scoped memory for tpu_custom_call.1']
    #allocation6 [shape = 'u8[512]{0}', space=vmem, size = 0x400, scoped, tag = 'input window, operand 1, single buffered']
    #allocation7 [shape = 's32[1]{0}', space=sflag, size = 0x4, scoped, tag = 'scoped memory for tpu_custom_call.1']
    #allocation8 [shape = 'u8[8192]{0}', space=vmem, size = 0x2000, scoped, tag = 'input window, operand 3, single buffered']
    #allocation9 [shape = 'u8[8192]{0}', space=vmem, size = 0x2000, scoped, tag = 'input window, operand 4, single buffered']
    #allocation10 [shape = 's32[1]{0}', space=sflag, size = 0x4, scoped, tag = 'scoped memory for tpu_custom_call.1']
    #allocation11 [shape = 'u8[8192]{0}', space=vmem, size = 0x2000, scoped, tag = 'input window, operand 5, single buffered']
    #allocation12 [shape = 'u8[4096]{0}', space=vmem, size = 0x1000, scoped, tag = 'output window, operand 0']
    #allocation13 [shape = 'u8[4096]{0}', space=vmem, size = 0x1000, scoped, tag = 'output window, operand 1']
    #allocation14 [shape = 's32[2]{0}', space=sflag, size = 0x8, scoped, tag = 'scoped memory for tpu_custom_call.1']
    #allocation15 [shape = 'u8[4096]{0}', space=vmem, size = 0x1000, scoped, tag = 'output window, operand 2']
    %17 = vsyncpa [#allocation4], 0
    %s18 = scalar_lea.sflag [#allocation4], 1
    %19 = vsyncpa %s18, 0
    %20 = vsyncpa [#allocation7], 0
    %21 = vsyncpa [#allocation10], 0
    %22 = vsyncpa [#allocation5], 0
    %s23 = scalar_lea.sflag [#allocation5], 1
    %24 = vsyncpa %s23, 0
    %25 = vsyncpa [#allocation14], 0
    %s26 = scalar_lea.sflag [#allocation14], 1
    %27 = vsyncpa %s26, 0
    loop: start=0, step=1, limit=4
    $region2: #{tpu_custom_call.1} parent=1 // loop_pre_header
      _
    $region3: #{tpu_custom_call.1} parent=1 // loop_header
      %s29 = sphi 0, %s33
      %p30 = scmp.ge.s32.totalorder %s29, 4
      %s36 = sphi 0, %s55
      %s37 = sphi 0, %s51
      %s38 = sphi 0, %s47
      %s39 = sphi 0, %s36
      %s40 = sphi 0, %s37
      %s41 = sphi 0, %s38
      %s42 = sphi 0, %s39
      %s43 = sphi 0, %s40
      %s44 = sphi 0, %s41
      %s60 = sphi 0, %s62
      %s63 = sphi 0, %s60
      %s64 = sphi 0, %s63
      %s80 = sphi 0, %s64
      %s84 = sphi 0, %s84
      %s86 = sphi 0, %s84
      %s87 = sphi 0, %s86
      %s101 = sphi 0, %s87
      %s105 = sphi 0, %s105
      %s107 = sphi 0, %s105
      %s108 = sphi 0, %s107
      %s122 = sphi 0, %s108
      %s128 = sphi 0, %s130
      %s131 = sphi 0, %s128
      %s132 = sphi 0, %s131
      %s148 = sphi 0, %s132
      %s154 = sphi 0, %s156
      %s157 = sphi 0, %s154
      %s158 = sphi 0, %s157
      %s174 = sphi 0, %s158
      %s180 = sphi 0, %s182
      %s183 = sphi 0, %s180
      %s184 = sphi 0, %s183
      %s200 = sphi 0, %s184
      %s206 = sphi 0, %s208
      %s209 = sphi 0, %s206
      %s210 = sphi 0, %s209
      %s226 = sphi 0, %s210
      %s232 = sphi 0, %s234
      %s235 = sphi 0, %s232
      %s236 = sphi 0, %s235
      %s252 = sphi 0, %s236
      %s258 = sphi 0, %s260
      %s261 = sphi 0, %s258
      %s262 = sphi 0, %s261
      %s278 = sphi 0, %s262
      %s288 = sphi 0, %s290
      %s291 = sphi 0, %s288
      %s292 = sphi 0, %s291
      %s308 = sphi 0, %s292
      %s318 = sphi 0, %s320
      %s321 = sphi 0, %s318
      %s322 = sphi 0, %s321
      %s338 = sphi 0, %s322
      %s348 = sphi 0, %s350
      %s351 = sphi 0, %s348
      %s352 = sphi 0, %s351
      %s368 = sphi 0, %s352
    $region4: #{tpu_custom_call.1} parent=1 // loop_header_branch
      %32 = sbr.rel (%p30) target = $region8
    $region5: #{tpu_custom_call.1} parent=1 // loop_body
      %s34 = ssub.s32 %s29, 1
      %s35 = ssub.s32 %s29, 2
      %s45 = sadd.s32 1, %s38
      %p46 = scmp.ge.s32.totalorder %s45, 1
      %s47 = scalar_select %p46, 0, %s45
      %s48 = sadd.s32 1, %s37
      %s49 = scalar_select %p46, %s48, %s37
      %p50 = scmp.ge.s32.totalorder %s49, 1
      %s51 = scalar_select %p50, 0, %s49
      %s52 = sadd.s32 1, %s36
      %s53 = scalar_select %p50, %s52, %s36
      %p54 = scmp.ge.s32.totalorder %s53, 2
      %s55 = scalar_select %p54, 0, %s53
      %s56 = ssub.s32 %s36, %s55
      %s57 = ssub.s32 %s37, %s51
      %s58 = sor.u32 %s56, %s57
      %p59 = scmp.eq.s32.totalorder %s58, 0
      %s61 = sadd.s32 %s60, 1
      %s62 = scalar_select %p59, %s60, %s61
      %p65 = pneg %p59
      %p66 = scmp.eq.s32.totalorder %s29, 1
      %p67 = por %p65, %p66
      %p68 = scmp.ne.s32.totalorder %s60, %s63
      %p69 = scmp.eq.s32.totalorder %s29, 0
      %p70 = por %p68, %p69
      %p71 = scmp.ne.s32.totalorder %s60, %s63
      %p72 = scmp.eq.s32.totalorder %s34, 1
      %p73 = por %p71, %p72
      %p74 = scmp.ne.s32.totalorder %s63, %s64
      %p75 = scmp.eq.s32.totalorder %s34, 0
      %p76 = por %p74, %p75
      %p77 = scmp.ne.s32.totalorder %s63, %s64
      %p78 = scmp.eq.s32.totalorder %s35, 1
      %p79 = por %p77, %p78
      %p81 = scmp.ne.s32.totalorder %s64, %s80
      %p82 = scmp.eq.s32.totalorder %s35, 0
      %p83 = por %p81, %p82
      %s85 = sadd.s32 %s84, 1
      %p88 = scmp.eq.s32.totalorder %s29, 1
      %p89 = scmp.ne.s32.totalorder %s84, %s86
      %p90 = scmp.eq.s32.totalorder %s29, 0
      %p91 = por %p89, %p90
      %p92 = scmp.ne.s32.totalorder %s84, %s86
      %p93 = scmp.eq.s32.totalorder %s34, 1
      %p94 = por %p92, %p93
      %p95 = scmp.ne.s32.totalorder %s86, %s87
      %p96 = scmp.eq.s32.totalorder %s34, 0
      %p97 = por %p95, %p96
      %p98 = scmp.ne.s32.totalorder %s86, %s87
      %p99 = scmp.eq.s32.totalorder %s35, 1
      %p100 = por %p98, %p99
      %p102 = scmp.ne.s32.totalorder %s87, %s101
      %p103 = scmp.eq.s32.totalorder %s35, 0
      %p104 = por %p102, %p103
      %s106 = sadd.s32 %s105, 1
      %p109 = scmp.eq.s32.totalorder %s29, 1
      %p110 = scmp.ne.s32.totalorder %s105, %s107
      %p111 = scmp.eq.s32.totalorder %s29, 0
      %p112 = por %p110, %p111
      %p113 = scmp.ne.s32.totalorder %s105, %s107
      %p114 = scmp.eq.s32.totalorder %s34, 1
      %p115 = por %p113, %p114
      %p116 = scmp.ne.s32.totalorder %s107, %s108
      %p117 = scmp.eq.s32.totalorder %s34, 0
      %p118 = por %p116, %p117
      %p119 = scmp.ne.s32.totalorder %s107, %s108
      %p120 = scmp.eq.s32.totalorder %s35, 1
      %p121 = por %p119, %p120
      %p123 = scmp.ne.s32.totalorder %s108, %s122
      %p124 = scmp.eq.s32.totalorder %s35, 0
      %p125 = por %p123, %p124
      %s126 = ssub.s32 %s38, %s47
      %p127 = scmp.eq.s32.totalorder %s126, 0
      %s129 = sadd.s32 %s128, 1
      %s130 = scalar_select %p127, %s128, %s129
      %p133 = pneg %p127
      %p134 = scmp.eq.s32.totalorder %s29, 1
      %p135 = por %p133, %p134
      %p136 = scmp.ne.s32.totalorder %s128, %s131
      %p137 = scmp.eq.s32.totalorder %s29, 0
      %p138 = por %p136, %p137
      %p139 = scmp.ne.s32.totalorder %s128, %s131
      %p140 = scmp.eq.s32.totalorder %s34, 1
      %p141 = por %p139, %p140
      %p142 = scmp.ne.s32.totalorder %s131, %s132
      %p143 = scmp.eq.s32.totalorder %s34, 0
      %p144 = por %p142, %p143
      %p145 = scmp.ne.s32.totalorder %s131, %s132
      %p146 = scmp.eq.s32.totalorder %s35, 1
      %p147 = por %p145, %p146
      %p149 = scmp.ne.s32.totalorder %s132, %s148
      %p150 = scmp.eq.s32.totalorder %s35, 0
      %p151 = por %p149, %p150
      %s152 = ssub.s32 %s38, %s47
      %p153 = scmp.eq.s32.totalorder %s152, 0
      %s155 = sadd.s32 %s154, 1
      %s156 = scalar_select %p153, %s154, %s155
      %p159 = pneg %p153
      %p160 = scmp.eq.s32.totalorder %s29, 1
      %p161 = por %p159, %p160
      %p162 = scmp.ne.s32.totalorder %s154, %s157
      %p163 = scmp.eq.s32.totalorder %s29, 0
      %p164 = por %p162, %p163
      %p165 = scmp.ne.s32.totalorder %s154, %s157
      %p166 = scmp.eq.s32.totalorder %s34, 1
      %p167 = por %p165, %p166
      %p168 = scmp.ne.s32.totalorder %s157, %s158
      %p169 = scmp.eq.s32.totalorder %s34, 0
      %p170 = por %p168, %p169
      %p171 = scmp.ne.s32.totalorder %s157, %s158
      %p172 = scmp.eq.s32.totalorder %s35, 1
      %p173 = por %p171, %p172
      %p175 = scmp.ne.s32.totalorder %s158, %s174
      %p176 = scmp.eq.s32.totalorder %s35, 0
      %p177 = por %p175, %p176
      %s178 = ssub.s32 %s38, %s47
      %p179 = scmp.eq.s32.totalorder %s178, 0
      %s181 = sadd.s32 %s180, 1
      %s182 = scalar_select %p179, %s180, %s181
      %p185 = pneg %p179
      %p186 = scmp.eq.s32.totalorder %s29, 1
      %p187 = por %p185, %p186
      %p188 = scmp.ne.s32.totalorder %s180, %s183
      %p189 = scmp.eq.s32.totalorder %s29, 0
      %p190 = por %p188, %p189
      %p191 = scmp.ne.s32.totalorder %s180, %s183
      %p192 = scmp.eq.s32.totalorder %s34, 1
      %p193 = por %p191, %p192
      %p194 = scmp.ne.s32.totalorder %s183, %s184
      %p195 = scmp.eq.s32.totalorder %s34, 0
      %p196 = por %p194, %p195
      %p197 = scmp.ne.s32.totalorder %s183, %s184
      %p198 = scmp.eq.s32.totalorder %s35, 1
      %p199 = por %p197, %p198
      %p201 = scmp.ne.s32.totalorder %s184, %s200
      %p202 = scmp.eq.s32.totalorder %s35, 0
      %p203 = por %p201, %p202
      %s204 = ssub.s32 %s38, %s47
      %p205 = scmp.eq.s32.totalorder %s204, 0
      %s207 = sadd.s32 %s206, 1
      %s208 = scalar_select %p205, %s206, %s207
      %p211 = pneg %p205
      %p212 = scmp.eq.s32.totalorder %s29, 1
      %p213 = por %p211, %p212
      %p214 = scmp.ne.s32.totalorder %s206, %s209
      %p215 = scmp.eq.s32.totalorder %s29, 0
      %p216 = por %p214, %p215
      %p217 = scmp.ne.s32.totalorder %s206, %s209
      %p218 = scmp.eq.s32.totalorder %s34, 1
      %p219 = por %p217, %p218
      %p220 = scmp.ne.s32.totalorder %s209, %s210
      %p221 = scmp.eq.s32.totalorder %s34, 0
      %p222 = por %p220, %p221
      %p223 = scmp.ne.s32.totalorder %s209, %s210
      %p224 = scmp.eq.s32.totalorder %s35, 1
      %p225 = por %p223, %p224
      %p227 = scmp.ne.s32.totalorder %s210, %s226
      %p228 = scmp.eq.s32.totalorder %s35, 0
      %p229 = por %p227, %p228
      %s230 = ssub.s32 %s38, %s47
      %p231 = scmp.eq.s32.totalorder %s230, 0
      %s233 = sadd.s32 %s232, 1
      %s234 = scalar_select %p231, %s232, %s233
      %p237 = pneg %p231
      %p238 = scmp.eq.s32.totalorder %s29, 1
      %p239 = por %p237, %p238
      %p240 = scmp.ne.s32.totalorder %s232, %s235
      %p241 = scmp.eq.s32.totalorder %s29, 0
      %p242 = por %p240, %p241
      %p243 = scmp.ne.s32.totalorder %s232, %s235
      %p244 = scmp.eq.s32.totalorder %s34, 1
      %p245 = por %p243, %p244
      %p246 = scmp.ne.s32.totalorder %s235, %s236
      %p247 = scmp.eq.s32.totalorder %s34, 0
      %p248 = por %p246, %p247
      %p249 = scmp.ne.s32.totalorder %s235, %s236
      %p250 = scmp.eq.s32.totalorder %s35, 1
      %p251 = por %p249, %p250
      %p253 = scmp.ne.s32.totalorder %s236, %s252
      %p254 = scmp.eq.s32.totalorder %s35, 0
      %p255 = por %p253, %p254
      %s256 = ssub.s32 %s38, %s47
      %p257 = scmp.eq.s32.totalorder %s256, 0
      %s259 = sadd.s32 %s258, 1
      %s260 = scalar_select %p257, %s258, %s259
      %p263 = pneg %p257
      %p264 = scmp.eq.s32.totalorder %s29, 1
      %p265 = por %p263, %p264
      %p266 = scmp.ne.s32.totalorder %s258, %s261
      %p267 = scmp.eq.s32.totalorder %s29, 0
      %p268 = por %p266, %p267
      %p269 = scmp.ne.s32.totalorder %s258, %s261
      %p270 = scmp.eq.s32.totalorder %s34, 1
      %p271 = por %p269, %p270
      %p272 = scmp.ne.s32.totalorder %s261, %s262
      %p273 = scmp.eq.s32.totalorder %s34, 0
      %p274 = por %p272, %p273
      %p275 = scmp.ne.s32.totalorder %s261, %s262
      %p276 = scmp.eq.s32.totalorder %s35, 1
      %p277 = por %p275, %p276
      %p279 = scmp.ne.s32.totalorder %s262, %s278
      %p280 = scmp.eq.s32.totalorder %s35, 0
      %p281 = por %p279, %p280
      %s282 = ssub.s32 %s36, %s55
      %s283 = ssub.s32 %s37, %s51
      %s284 = sor.u32 %s282, %s283
      %s285 = ssub.s32 %s38, %s47
      %s286 = sor.u32 %s284, %s285
      %p287 = scmp.eq.s32.totalorder %s286, 0
      %s289 = sadd.s32 %s288, 1
      %s290 = scalar_select %p287, %s288, %s289
      %p293 = pneg %p287
      %p294 = scmp.eq.s32.totalorder %s29, 1
      %p295 = por %p293, %p294
      %p296 = scmp.ne.s32.totalorder %s288, %s291
      %p297 = scmp.eq.s32.totalorder %s29, 0
      %p298 = por %p296, %p297
      %p299 = scmp.ne.s32.totalorder %s288, %s291
      %p300 = scmp.eq.s32.totalorder %s34, 1
      %p301 = por %p299, %p300
      %p302 = scmp.ne.s32.totalorder %s291, %s292
      %p303 = scmp.eq.s32.totalorder %s34, 0
      %p304 = por %p302, %p303
      %p305 = scmp.ne.s32.totalorder %s291, %s292
      %p306 = scmp.eq.s32.totalorder %s35, 1
      %p307 = por %p305, %p306
      %p309 = scmp.ne.s32.totalorder %s292, %s308
      %p310 = scmp.eq.s32.totalorder %s35, 0
      %p311 = por %p309, %p310
      %s312 = ssub.s32 %s36, %s55
      %s313 = ssub.s32 %s37, %s51
      %s314 = sor.u32 %s312, %s313
      %s315 = ssub.s32 %s38, %s47
      %s316 = sor.u32 %s314, %s315
      %p317 = scmp.eq.s32.totalorder %s316, 0
      %s319 = sadd.s32 %s318, 1
      %s320 = scalar_select %p317, %s318, %s319
      %p323 = pneg %p317
      %p324 = scmp.eq.s32.totalorder %s29, 1
      %p325 = por %p323, %p324
      %p326 = scmp.ne.s32.totalorder %s318, %s321
      %p327 = scmp.eq.s32.totalorder %s29, 0
      %p328 = por %p326, %p327
      %p329 = scmp.ne.s32.totalorder %s318, %s321
      %p330 = scmp.eq.s32.totalorder %s34, 1
      %p331 = por %p329, %p330
      %p332 = scmp.ne.s32.totalorder %s321, %s322
      %p333 = scmp.eq.s32.totalorder %s34, 0
      %p334 = por %p332, %p333
      %p335 = scmp.ne.s32.totalorder %s321, %s322
      %p336 = scmp.eq.s32.totalorder %s35, 1
      %p337 = por %p335, %p336
      %p339 = scmp.ne.s32.totalorder %s322, %s338
      %p340 = scmp.eq.s32.totalorder %s35, 0
      %p341 = por %p339, %p340
      %s342 = ssub.s32 %s36, %s55
      %s343 = ssub.s32 %s37, %s51
      %s344 = sor.u32 %s342, %s343
      %s345 = ssub.s32 %s38, %s47
      %s346 = sor.u32 %s344, %s345
      %p347 = scmp.eq.s32.totalorder %s346, 0
      %s349 = sadd.s32 %s348, 1
      %s350 = scalar_select %p347, %s348, %s349
      %p353 = pneg %p347
      %p354 = scmp.eq.s32.totalorder %s29, 1
      %p355 = por %p353, %p354
      %p356 = scmp.ne.s32.totalorder %s348, %s351
      %p357 = scmp.eq.s32.totalorder %s29, 0
      %p358 = por %p356, %p357
      %p359 = scmp.ne.s32.totalorder %s348, %s351
      %p360 = scmp.eq.s32.totalorder %s34, 1
      %p361 = por %p359, %p360
      %p362 = scmp.ne.s32.totalorder %s351, %s352
      %p363 = scmp.eq.s32.totalorder %s34, 0
      %p364 = por %p362, %p363
      %p365 = scmp.ne.s32.totalorder %s351, %s352
      %p366 = scmp.eq.s32.totalorder %s35, 1
      %p367 = por %p365, %p366
      %p369 = scmp.ne.s32.totalorder %s352, %s368
      %p370 = scmp.eq.s32.totalorder %s35, 0
      %p371 = por %p369, %p370
      %p372 = scmp.le.s32.totalorder 1, %s29
      %p373 = scmp.lt.s32.totalorder %s29, 3
      %p374 = pnand %p372, %p373
      %p375 = pneg %p374
      // Predicated region
      $region9: #{tpu_custom_call.1} parent=5 // pred_check
        _
      $region10: #{tpu_custom_call.1} parent=5 // pred_check_branch
        %377 = sbr.rel (%p374) target = $region12
      $region11: #{tpu_custom_call.1} parent=5 // pred_region
        %s378 = ssub.s32 %s29, 1
        // Predicated region
        $region13: #{tpu_custom_call.1} parent=11 // pred_check
          %p379 = pneg %p97
        $region14: #{tpu_custom_call.1} parent=11 // pred_check_branch
          %381 = sbr.rel (%p379) target = $region16
        $region15: #{tpu_custom_call.1} parent=11 // pred_region
          %383 = vsyncadd [#allocation7], 0
          %s385 = sshll.u32 %s1, 4
          %s386 = int_to_ptr.hbm [resolvable:$true] %s385
          %s387 = sshll.u32 [#allocation6], 4
          %s388 = int_to_ptr.vmem [resolvable:$true] %s387
          %390 = dma.hbm_to_vmem [thread:$0]  %s386, 16, %s388, [#allocation7]
        $region16: #{tpu_custom_call.1} parent=11 // pred_fallthru
          _
        // Predicated region
        $region17: #{tpu_custom_call.1} parent=11 // pred_check
          %p391 = pneg %p118
        $region18: #{tpu_custom_call.1} parent=11 // pred_check_branch
          %393 = sbr.rel (%p391) target = $region20
        $region19: #{tpu_custom_call.1} parent=11 // pred_region
          _
        $region20: #{tpu_custom_call.1} parent=11 // pred_fallthru
          _
        // Predicated region
        $region21: #{tpu_custom_call.1} parent=11 // pred_check
          %p394 = pneg %p144
        $region22: #{tpu_custom_call.1} parent=11 // pred_check_branch
          %396 = sbr.rel (%p394) target = $region24
        $region23: #{tpu_custom_call.1} parent=11 // pred_region
          %398 = vsyncadd [#allocation7], 0
          %s399 = smul.addr %s41, 4
          %s400 = scalar_lea.hbm %s3, %s399
          %s401 = sshll.u32 %s400, 4
          %s402 = int_to_ptr.hbm [resolvable:$true] %s401
          %s403 = sshll.u32 [#allocation8], 4
          %s404 = int_to_ptr.vmem [resolvable:$true] %s403
          %409 = dma.hbm_to_vmem [thread:$0]  %s402, 256, %s404, [#allocation7], 64, 64, 4
        $region24: #{tpu_custom_call.1} parent=11 // pred_fallthru
          _
        // Predicated region
        $region25: #{tpu_custom_call.1} parent=11 // pred_check
          %p410 = pneg %p170
        $region26: #{tpu_custom_call.1} parent=11 // pred_check_branch
          %412 = sbr.rel (%p410) target = $region28
        $region27: #{tpu_custom_call.1} parent=11 // pred_region
          %414 = vsyncadd [#allocation10], 0
          %s415 = smul.addr %s41, 4
          %s416 = scalar_lea.hbm %s4, %s415
          %s417 = sshll.u32 %s416, 4
          %s418 = int_to_ptr.hbm [resolvable:$true] %s417
          %s419 = sshll.u32 [#allocation9], 4
          %s420 = int_to_ptr.vmem [resolvable:$true] %s419
          %425 = dma.hbm_to_vmem [thread:$0]  %s418, 256, %s420, [#allocation10], 64, 64, 4
        $region28: #{tpu_custom_call.1} parent=11 // pred_fallthru
          _
        // Predicated region
        $region29: #{tpu_custom_call.1} parent=11 // pred_check
          %p426 = pneg %p196
        $region30: #{tpu_custom_call.1} parent=11 // pred_check_branch
          %428 = sbr.rel (%p426) target = $region32
        $region31: #{tpu_custom_call.1} parent=11 // pred_region
          %430 = vsyncadd [#allocation10], 0
          %s431 = smul.addr %s41, 4
          %s432 = scalar_lea.hbm %s5, %s431
          %s433 = sshll.u32 %s432, 4
          %s434 = int_to_ptr.hbm [resolvable:$true] %s433
          %s435 = sshll.u32 [#allocation11], 4
          %s436 = int_to_ptr.vmem [resolvable:$true] %s435
          %441 = dma.hbm_to_vmem [thread:$0]  %s434, 256, %s436, [#allocation10], 64, 64, 4
        $region32: #{tpu_custom_call.1} parent=11 // pred_fallthru
          _
        // Predicated region
        $region33: #{tpu_custom_call.1} parent=11 // pred_check
          %p442 = pneg %p222
        $region34: #{tpu_custom_call.1} parent=11 // pred_check_branch
          %444 = sbr.rel (%p442) target = $region36
        $region35: #{tpu_custom_call.1} parent=11 // pred_region
          %p445 = scmp.lt.s32.totalorder %s41, 0
          %s446 = scalar_select %p445, %s41, 0
          %s447 = scalar_lea.vmem %s6, %s446
        $region36: #{tpu_custom_call.1} parent=11 // pred_fallthru
          _
        // Predicated region
        $region37: #{tpu_custom_call.1} parent=11 // pred_check
          %p448 = pneg %p248
        $region38: #{tpu_custom_call.1} parent=11 // pred_check_branch
          %450 = sbr.rel (%p448) target = $region40
        $region39: #{tpu_custom_call.1} parent=11 // pred_region
          %p451 = scmp.lt.s32.totalorder %s41, 0
          %s452 = scalar_select %p451, %s41, 0
          %s453 = scalar_lea.vmem %s7, %s452
        $region40: #{tpu_custom_call.1} parent=11 // pred_fallthru
          _
        // Predicated region
        $region41: #{tpu_custom_call.1} parent=11 // pred_check
          %p454 = pneg %p274
        $region42: #{tpu_custom_call.1} parent=11 // pred_check_branch
          %456 = sbr.rel (%p454) target = $region44
        $region43: #{tpu_custom_call.1} parent=11 // pred_region
          %p457 = scmp.lt.s32.totalorder %s41, 0
          %s458 = scalar_select %p457, %s41, 0
          %s459 = scalar_lea.vmem %s8, %s458
        $region44: #{tpu_custom_call.1} parent=11 // pred_fallthru
          _
      $region12: #{tpu_custom_call.1} parent=5 // pred_fallthru
        _
      %p460 = scmp.lt.s32.totalorder %s29, 2
      // Predicated region
      $region45: #{tpu_custom_call.1} parent=5 // pred_check
        %p461 = pneg %p460
      $region46: #{tpu_custom_call.1} parent=5 // pred_check_branch
        %463 = sbr.rel (%p461) target = $region48
      $region47: #{tpu_custom_call.1} parent=5 // pred_region
        // Predicated region
        $region49: #{tpu_custom_call.1} parent=47 // pred_check
          %p464 = pneg %p70
        $region50: #{tpu_custom_call.1} parent=47 // pred_check_branch
          %466 = sbr.rel (%p464) target = $region52
        $region51: #{tpu_custom_call.1} parent=47 // pred_region
          %s467 = sand.u32 %s60, 1
          %s468 = scalar_lea.sflag [#allocation4], %s467
          %s469 = sand.u32 %s60, 1
          %s470 = smul.addr %s469, 8
          %s471 = scalar_lea.vmem [#allocation3], %s470
          %473 = vsyncadd %s468, 0
          %s474 = sadd.s32 %s37, %s36
          %s475 = smul.addr %s474, 8
          %s476 = scalar_lea.hbm %s0, %s475
          %s478 = sshll.u32 %s476, 4
          %s479 = int_to_ptr.hbm [resolvable:$true] %s478
          %s480 = sshll.u32 %s471, 4
          %s481 = int_to_ptr.vmem [resolvable:$true] %s480
          %483 = dma.hbm_to_vmem [thread:$0]  %s479, 128, %s481, %s468
        $region52: #{tpu_custom_call.1} parent=47 // pred_fallthru
          _
      $region48: #{tpu_custom_call.1} parent=5 // pred_fallthru
        _
      %p484 = scmp.le.s32.totalorder 1, %s29
      %p485 = scmp.lt.s32.totalorder %s29, 3
      %p486 = pnand %p484, %p485
      %p487 = pneg %p486
      // Predicated region
      $region53: #{tpu_custom_call.1} parent=5 // pred_check
        _
      $region54: #{tpu_custom_call.1} parent=5 // pred_check_branch
        %489 = sbr.rel (%p486) target = $region56
      $region55: #{tpu_custom_call.1} parent=5 // pred_region
        %s490 = ssub.s32 %s29, 1
        %s491 = sand.u32 %s63, 1
        %s492 = scalar_lea.sflag [#allocation4], %s491
        %s493 = sand.u32 %s63, 1
        %s494 = smul.addr %s493, 8
        %s495 = scalar_lea.vmem [#allocation3], %s494
        // Predicated region
        $region57: #{tpu_custom_call.1} parent=55 // pred_check
          %p496 = pneg %p76
        $region58: #{tpu_custom_call.1} parent=55 // pred_check_branch
          %498 = sbr.rel (%p496) target = $region60
        $region59: #{tpu_custom_call.1} parent=55 // pred_region
          %500 = dma.done %s492, 128
        $region60: #{tpu_custom_call.1} parent=55 // pred_fallthru
          _
        // Predicated region
        $region61: #{tpu_custom_call.1} parent=55 // pred_check
          %p501 = pneg %p97
        $region62: #{tpu_custom_call.1} parent=55 // pred_check_branch
          %503 = sbr.rel (%p501) target = $region64
        $region63: #{tpu_custom_call.1} parent=55 // pred_region
          %505 = dma.done [#allocation7], 16
        $region64: #{tpu_custom_call.1} parent=55 // pred_fallthru
          _
        // Predicated region
        $region65: #{tpu_custom_call.1} parent=55 // pred_check
          %p506 = pneg %p144
        $region66: #{tpu_custom_call.1} parent=55 // pred_check_branch
          %508 = sbr.rel (%p506) target = $region68
        $region67: #{tpu_custom_call.1} parent=55 // pred_region
          %510 = dma.done [#allocation7], 256
        $region68: #{tpu_custom_call.1} parent=55 // pred_fallthru
          _
        // Predicated region
        $region69: #{tpu_custom_call.1} parent=55 // pred_check
          %p511 = pneg %p170
        $region70: #{tpu_custom_call.1} parent=55 // pred_check_branch
          %513 = sbr.rel (%p511) target = $region72
        $region71: #{tpu_custom_call.1} parent=55 // pred_region
          %515 = dma.done [#allocation10], 256
        $region72: #{tpu_custom_call.1} parent=55 // pred_fallthru
          _
        // Predicated region
        $region73: #{tpu_custom_call.1} parent=55 // pred_check
          %p516 = pneg %p196
        $region74: #{tpu_custom_call.1} parent=55 // pred_check_branch
          %518 = sbr.rel (%p516) target = $region76
        $region75: #{tpu_custom_call.1} parent=55 // pred_region
          %520 = dma.done [#allocation10], 256
        $region76: #{tpu_custom_call.1} parent=55 // pred_fallthru
          _
        %s521 = sand.u32 %s63, 1
        %s522 = scalar_lea.sflag [#allocation4], %s521
        %s523 = sand.u32 %s63, 1
        %s524 = smul.addr %s523, 8
        %s525 = scalar_lea.vmem [#allocation3], %s524
        %p526 = pneg %p76
        %p527 = pneg %p73
        %p528 = pneg %p97
        %p529 = pneg %p94
        %p530 = pneg %p118
        %p531 = pneg %p115
        %p532 = pneg %p144
        %p533 = pneg %p141
        %p534 = pneg %p170
        %p535 = pneg %p167
        %p536 = pneg %p196
        %p537 = pneg %p193
        %p538 = scmp.lt.s32.totalorder %s41, 0
        %s539 = scalar_select %p538, %s41, 0
        %s540 = scalar_lea.vmem %s6, %s539
        %p541 = pneg %p222
        %p542 = pneg %p219
        %p543 = scmp.lt.s32.totalorder %s41, 0
        %s544 = scalar_select %p543, %s41, 0
        %s545 = scalar_lea.vmem %s7, %s544
        %p546 = pneg %p248
        %p547 = pneg %p245
        %p548 = scmp.lt.s32.totalorder %s41, 0
        %s549 = scalar_select %p548, %s41, 0
        %s550 = scalar_lea.vmem %s8, %s549
        %p551 = pneg %p274
        %p552 = pneg %p271
        %p553 = pneg %p304
        %p554 = pneg %p301
        %s555 = sand.u32 %s291, 1
        %s556 = scalar_lea.sflag [#allocation5], %s555
        %s557 = sand.u32 %s291, 1
        %s558 = smul.addr %s557, 4
        %s559 = scalar_lea.vmem [#allocation12], %s558
        %p560 = pneg %p334
        %p561 = pneg %p331
        %s562 = sand.u32 %s34, 1
        %s563 = scalar_lea.sflag [#allocation14], %s562
        %s564 = sand.u32 %s321, 1
        %s565 = smul.addr %s564, 4
        %s566 = scalar_lea.vmem [#allocation13], %s565
        %p567 = pneg %p364
        %p568 = pneg %p361
        %s569 = sand.u32 %s34, 1
        %s570 = scalar_lea.sflag [#allocation14], %s569
        %s571 = sand.u32 %s351, 1
        %s572 = smul.addr %s571, 4
        %s573 = scalar_lea.vmem [#allocation15], %s572
        %p574 = scmp.lt.s32.totalorder %s41, 0
        %s575 = scalar_select %p574, %s41, 0
        %s576 = scalar_lea.vmem %s6, %s575
        %p577 = scmp.lt.s32.totalorder %s41, 0
        %s578 = scalar_select %p577, %s41, 0
        %s579 = scalar_lea.vmem %s7, %s578
        %p580 = scmp.lt.s32.totalorder %s41, 0
        %s581 = scalar_select %p580, %s41, 0
        %s582 = scalar_lea.vmem %s8, %s581
        %p584 = scmp.eq.s32.totalorder %s41, 0
        // Predicated region
        $region77: #{tpu_custom_call.1} parent=55 // pred_check
          %p585 = pneg %p584
        $region78: #{tpu_custom_call.1} parent=55 // pred_check_branch
          %587 = sbr.rel (%p585) target = $region80
        $region79: #{tpu_custom_call.1} parent=55 // pred_region
          %v588 = vld [vmem:[%s495] sm:$0xff]
          %v589 = vld [vmem:[#allocation6] sm:$0x1]
          %v590 = vld [vmem:[%s2] sm:$0x1]
          %vm591 = vcmask 261120
          %v592 = vsel %vm591, %v588, 0.0
          %593 = vadd.xlane.f32.xlu0 %v592
          %v594 = vpop.xlane.xlu0 %593
          %v595 = vrcp.pop 32.0
          %v596 = vmul.f32 32.0, %v595
          %v597 = vsub.f32 1.0, %v596
          %v598 = vmul.f32 %v595, %v597
          %v599 = vadd.f32 %v595, %v598
          %vm600 = vweird.f32 %v595
          %v601 = vsel %vm600, %v595, %v599
          %v602 = vmul.f32 %v594, %v601
          %v603 = vsub.f32 %v588, %v602
          %v604 = vmul.f32 %v603, %v603
          %v605 = vsel %vm591, %v604, 0.0
          %606 = vadd.xlane.f32.xlu0 %v605
          %v607 = vpop.xlane.xlu0 %606
          %v608 = vmul.f32 %v607, %v601
          %v609 = vadd.f32 %v608, 1e-05
          %v610 = vrsqrt.pop %v609
          %v611 = vmul.f32 %v610, %v609
          %v612 = vmul.f32 %v611, %v610
          %v613 = vmul.f32 0.5, %v612
          %v614 = vsub.f32 1.5, %v613
          %v615 = vmul.f32 %v610, %v614
          %vm616 = vweird.f32 %v609
          %vm617 = vweird.f32 %v610
          %vm618 = vmor %vm616, %vm617
          %v619 = vsel %vm618, %v610, %v615
          %v620 = vmul.f32 %v603, %v619
          %v622 = vperm.slane %v589, 0
          %v624 = vmul.f32 %v620, %v622
          %v626 = vperm.slane %v590, 0
          %v628 = vadd.f32 %v624, %v626
          %v629 = vpack.c.bf16 %v628, %v628
          %vm630 = vcmask 257024
          %631 = vst.msk [vmem:[#allocation2] sm:$0xf] %vm630, %v629
        $region80: #{tpu_custom_call.1} parent=55 // pred_fallthru
          _
        %v632 = vld [vmem:[#allocation2] sm:$0xf]
        %v633 = vld [vmem:[#allocation8] sm:$0xf]
        %v634 = vld [vmem:[#allocation8 + $0x4] sm:$0xf]
        %v635 = vld [vmem:[#allocation8 + $0x8] sm:$0xf]
        %v636 = vld [vmem:[#allocation8 + $0xc] sm:$0xf]
        %v637 = vld [vmem:[%s576] sm:$0x1]
        %v639 = vperm.slane %v637, 0
        %v645 = vunpack.c.l.b16 %v633
        %v646 = vunpack.c.l.b16 %v634
        %v647 = vunpack.c.l.b16 %v635
        %v648 = vunpack.c.l.b16 %v636
        %v649 = vpack.c.b16 %v646, %v645
        %v650 = vpack.c.b16 %v648, %v647
        %vm653 = vcmask 261120
        %v655 = vsel %vm653, %v632, 0
        %657 = vmatpush.bf16.msra.mxu0 0
        %658 = vmatpush.bf16.msra.mxu0 0
        %659 = vmatpush.bf16.msra.mxu0 0
        %660 = vmatpush.bf16.msra.mxu0 0
        %661 = vmatpush.bf16.msra.mxu0 0
        %662 = vmatpush.bf16.msra.mxu0 0
        %663 = vmatpush.bf16.msra.mxu0 %v650
        %664 = vmatpush.bf16.msra.mxu0 %v649
        %665 = vmatmul.bf16.gmra.mxu0 %v655
        %v666 = vpop.f32.mrf.mxu0
        %v667 = vadd.f32 %v639, %v666
        %v668 = vpop.f32.mrf.mxu0
        %669 = vdwg.mxu0
        %v670 = vpack.c.bf16 %v667, %v667
        %vm671 = vcmask 257024
        %672 = vst.msk [vmem:[%s559] sm:$0xf] %vm671, %v670
        %v673 = vld [vmem:[#allocation9] sm:$0xf]
        %v674 = vld [vmem:[#allocation9 + $0x4] sm:$0xf]
        %v675 = vld [vmem:[#allocation9 + $0x8] sm:$0xf]
        %v676 = vld [vmem:[#allocation9 + $0xc] sm:$0xf]
        %v677 = vld [vmem:[%s579] sm:$0x1]
        %v679 = vperm.slane %v677, 0
        %v685 = vunpack.c.l.b16 %v673
        %v686 = vunpack.c.l.b16 %v674
        %v687 = vunpack.c.l.b16 %v675
        %v688 = vunpack.c.l.b16 %v676
        %v689 = vpack.c.b16 %v686, %v685
        %v690 = vpack.c.b16 %v688, %v687
        %693 = vmatpush.bf16.msra.mxu0 0
        %694 = vmatpush.bf16.msra.mxu0 0
        %695 = vmatpush.bf16.msra.mxu0 0
        %696 = vmatpush.bf16.msra.mxu0 0
        %697 = vmatpush.bf16.msra.mxu0 0
        %698 = vmatpush.bf16.msra.mxu0 0
        %699 = vmatpush.bf16.msra.mxu0 %v690
        %700 = vmatpush.bf16.msra.mxu0 %v689
        %701 = vmatmul.bf16.gmra.mxu0 %v655
        %v702 = vpop.f32.mrf.mxu0
        %v703 = vadd.f32 %v679, %v702
        %v704 = vpop.f32.mrf.mxu0
        %705 = vdwg.mxu0
        %v706 = vpack.c.bf16 %v703, %v703
        %707 = vst.msk [vmem:[%s566] sm:$0xf] %vm671, %v706
        %v708 = vld [vmem:[#allocation11] sm:$0xf]
        %v709 = vld [vmem:[#allocation11 + $0x4] sm:$0xf]
        %v710 = vld [vmem:[#allocation11 + $0x8] sm:$0xf]
        %v711 = vld [vmem:[#allocation11 + $0xc] sm:$0xf]
        %v712 = vld [vmem:[%s582] sm:$0x1]
        %v714 = vperm.slane %v712, 0
        %v720 = vunpack.c.l.b16 %v708
        %v721 = vunpack.c.l.b16 %v709
        %v722 = vunpack.c.l.b16 %v710
        %v723 = vunpack.c.l.b16 %v711
        %v724 = vpack.c.b16 %v721, %v720
        %v725 = vpack.c.b16 %v723, %v722
        %728 = vmatpush.bf16.msra.mxu0 0
        %729 = vmatpush.bf16.msra.mxu0 0
        %730 = vmatpush.bf16.msra.mxu0 0
        %731 = vmatpush.bf16.msra.mxu0 0
        %732 = vmatpush.bf16.msra.mxu0 0
        %733 = vmatpush.bf16.msra.mxu0 0
        %734 = vmatpush.bf16.msra.mxu0 %v725
        %735 = vmatpush.bf16.msra.mxu0 %v724
        %736 = vmatmul.bf16.gmra.mxu0 %v655
        %v737 = vpop.f32.mrf.mxu0
        %v738 = vadd.f32 %v714, %v737
        %v739 = vpop.f32.mrf.mxu0
        %740 = vdwg.mxu0
        %v741 = vpack.c.bf16 %v738, %v738
        %742 = vst.msk [vmem:[%s573] sm:$0xf] %vm671, %v741
        %s743 = sand.u32 %s291, 1
        %s744 = scalar_lea.sflag [#allocation5], %s743
        %s745 = sand.u32 %s291, 1
        %s746 = smul.addr %s745, 4
        %s747 = scalar_lea.vmem [#allocation12], %s746
        %s748 = sand.u32 %s34, 1
        %s749 = scalar_lea.sflag [#allocation14], %s748
        %s750 = sand.u32 %s321, 1
        %s751 = smul.addr %s750, 4
        %s752 = scalar_lea.vmem [#allocation13], %s751
        %s753 = sand.u32 %s34, 1
        %s754 = scalar_lea.sflag [#allocation14], %s753
        %s755 = sand.u32 %s351, 1
        %s756 = smul.addr %s755, 4
        %s757 = scalar_lea.vmem [#allocation15], %s756
        // Predicated region
        $region81: #{tpu_custom_call.1} parent=55 // pred_check
          %p758 = pneg %p301
        $region82: #{tpu_custom_call.1} parent=55 // pred_check_branch
          %760 = sbr.rel (%p758) target = $region84
        $region83: #{tpu_custom_call.1} parent=55 // pred_region
          %762 = vsyncadd %s744, 0
          %s763 = sadd.s32 %s41, %s40
          %s764 = sadd.s32 %s763, %s39
          %s765 = smul.addr %s764, 4
          %s766 = scalar_lea.hbm %s9, %s765
          %s768 = sshll.u32 %s747, 4
          %s769 = int_to_ptr.vmem [resolvable:$true] %s768
          %s770 = sshll.u32 %s766, 4
          %s771 = int_to_ptr.hbm [resolvable:$true] %s770
          %773 = dma.vmem_to_hbm [thread:$0]  %s769, 64, %s771, %s744
        $region84: #{tpu_custom_call.1} parent=55 // pred_fallthru
          _
        // Predicated region
        $region85: #{tpu_custom_call.1} parent=55 // pred_check
          %p774 = pneg %p331
        $region86: #{tpu_custom_call.1} parent=55 // pred_check_branch
          %776 = sbr.rel (%p774) target = $region88
        $region87: #{tpu_custom_call.1} parent=55 // pred_region
          %778 = vsyncadd %s749, 0
          %s779 = sadd.s32 %s41, %s40
          %s780 = sadd.s32 %s779, %s39
          %s781 = smul.addr %s780, 4
          %s782 = scalar_lea.hbm %s10, %s781
          %s784 = sshll.u32 %s752, 4
          %s785 = int_to_ptr.vmem [resolvable:$true] %s784
          %s786 = sshll.u32 %s782, 4
          %s787 = int_to_ptr.hbm [resolvable:$true] %s786
          %789 = dma.vmem_to_hbm [thread:$0]  %s785, 64, %s787, %s749
        $region88: #{tpu_custom_call.1} parent=55 // pred_fallthru
          _
        // Predicated region
        $region89: #{tpu_custom_call.1} parent=55 // pred_check
          %p790 = pneg %p361
        $region90: #{tpu_custom_call.1} parent=55 // pred_check_branch
          %792 = sbr.rel (%p790) target = $region92
        $region91: #{tpu_custom_call.1} parent=55 // pred_region
          %794 = vsyncadd %s754, 0
          %s795 = sadd.s32 %s41, %s40
          %s796 = sadd.s32 %s795, %s39
          %s797 = smul.addr %s796, 4
          %s798 = scalar_lea.hbm %s11, %s797
          %s800 = sshll.u32 %s757, 4
          %s801 = int_to_ptr.vmem [resolvable:$true] %s800
          %s802 = sshll.u32 %s798, 4
          %s803 = int_to_ptr.hbm [resolvable:$true] %s802
          %805 = dma.vmem_to_hbm [thread:$0]  %s801, 64, %s803, %s754
        $region92: #{tpu_custom_call.1} parent=55 // pred_fallthru
          _
      $region56: #{tpu_custom_call.1} parent=5 // pred_fallthru
        _
      %p806 = scmp.le.s32.totalorder 2, %s29
      // Predicated region
      $region93: #{tpu_custom_call.1} parent=5 // pred_check
        %p807 = pneg %p806
      $region94: #{tpu_custom_call.1} parent=5 // pred_check_branch
        %809 = sbr.rel (%p807) target = $region96
      $region95: #{tpu_custom_call.1} parent=5 // pred_region
        %s810 = ssub.s32 %s29, 2
        // Predicated region
        $region97: #{tpu_custom_call.1} parent=95 // pred_check
          %p811 = pneg %p307
        $region98: #{tpu_custom_call.1} parent=95 // pred_check_branch
          %813 = sbr.rel (%p811) target = $region100
        $region99: #{tpu_custom_call.1} parent=95 // pred_region
          %s814 = sand.u32 %s292, 1
          %s815 = scalar_lea.sflag [#allocation5], %s814
          %s816 = sand.u32 %s292, 1
          %s817 = smul.addr %s816, 4
          %s818 = scalar_lea.vmem [#allocation12], %s817
          %820 = dma.done %s815, 64
        $region100: #{tpu_custom_call.1} parent=95 // pred_fallthru
          _
        // Predicated region
        $region101: #{tpu_custom_call.1} parent=95 // pred_check
          %p821 = pneg %p337
        $region102: #{tpu_custom_call.1} parent=95 // pred_check_branch
          %823 = sbr.rel (%p821) target = $region104
        $region103: #{tpu_custom_call.1} parent=95 // pred_region
          %s824 = sand.u32 %s35, 1
          %s825 = scalar_lea.sflag [#allocation14], %s824
          %s826 = sand.u32 %s322, 1
          %s827 = smul.addr %s826, 4
          %s828 = scalar_lea.vmem [#allocation13], %s827
          %830 = dma.done %s825, 64
        $region104: #{tpu_custom_call.1} parent=95 // pred_fallthru
          _
        // Predicated region
        $region105: #{tpu_custom_call.1} parent=95 // pred_check
          %p831 = pneg %p367
        $region106: #{tpu_custom_call.1} parent=95 // pred_check_branch
          %833 = sbr.rel (%p831) target = $region108
        $region107: #{tpu_custom_call.1} parent=95 // pred_region
          %s834 = sand.u32 %s35, 1
          %s835 = scalar_lea.sflag [#allocation14], %s834
          %s836 = sand.u32 %s352, 1
          %s837 = smul.addr %s836, 4
          %s838 = scalar_lea.vmem [#allocation15], %s837
          %840 = dma.done %s835, 64
        $region108: #{tpu_custom_call.1} parent=95 // pred_fallthru
          _
      $region96: #{tpu_custom_call.1} parent=5 // pred_fallthru
        _
    $region6: #{tpu_custom_call.1} parent=1 // loop_footer
      %s33 = sadd.s32 1, %s29
    $region7: #{tpu_custom_call.1} parent=1 // loop_footer_branch
      %28 = sbr.rel target = $region3
    $region8: #{tpu_custom_call.1} parent=1 // loop_exit
      _
    %841 = vsyncpa [#allocation4], 1
    %s842 = scalar_lea.sflag [#allocation4], 1
    %843 = vsyncpa %s842, 1
    %844 = vsyncpa [#allocation7], 1
    %845 = vsyncpa [#allocation10], 1
    %846 = vsyncpa [#allocation5], 1
    %s847 = scalar_lea.sflag [#allocation5], 1
    %848 = vsyncpa %s847, 1
    %849 = vsyncpa [#allocation14], 1
    %s850 = scalar_lea.sflag [#allocation14], 1
    %851 = vsyncpa %s850, 1

</llo_original>
